<compile_context>
chip_gen: v7x
topology: tpu7x:2x2x1
jax: 0.10.0
libtpu: 0.0.40
codegen_flags: <defaults>
</compile_context>

<pallas_src>
from functools import partial

import jax
import jax.numpy as jnp
from jax import lax
from jax.experimental import pallas as pl
from jax.experimental.pallas import tpu as pltpu

GROUPS = 32
EPS = 1e-5


def _tcb_kernel(x_ref, gamma_ref, beta_ref, w_ref, b_ref, o_ref, h_ref, *, S):
    """One (batch, stage) grid step.

    x_ref:     (1, L, C)   input block (same block reused for all 4 stages of a batch)
    gamma_ref: (1, 1, C)   GN scale for this stage (f32)
    beta_ref:  (1, 1, C)   GN shift for this stage (f32)
    w_ref:     (1, 3C, C)  conv weights for this stage, taps stacked on rows (bf16)
    b_ref:     (1, 1, C)   conv bias for this stage (f32)
    o_ref:     (1, L, C)   output block (written only at the last stage)
    h_ref:     (L, C) f32  persistent VMEM scratch carrying the activation between stages
    """
    L, C = h_ref.shape
    stage = pl.program_id(1)
    last = pl.num_programs(1) - 1
    cs = C // GROUPS
    n_per_group = jnp.float32(L * cs)

    # Stage 0 seeds the carried activation from the input block.
    @pl.when(stage == 0)
    def _():
        h_ref[...] = x_ref[0].astype(jnp.float32)

    h = h_ref[...]                                      # (L, C) f32

    gamma = gamma_ref[0]                                # (1, C)
    beta = beta_ref[0]
    bias = b_ref[0]

    # ---- GroupNorm(32, C) --------------------------------------------------
    # Per-channel sums -> (C,32) group-membership matmul -> (32,C) expansion.
    # Membership matrices built from iota (no integer division, no HBM input).
    # TODO(synk): single-pass E[x^2]-E[x]^2 in f32; switch to two-pass stats if
    # production shapes show cancellation issues.
    c_idx = lax.broadcasted_iota(jnp.int32, (C, GROUPS), 0)
    g_lo = lax.broadcasted_iota(jnp.int32, (C, GROUPS), 1) * cs
    gm = ((c_idx >= g_lo) & (c_idx < g_lo + cs)).astype(jnp.float32)      # (C, 32)
    g_loT = lax.broadcasted_iota(jnp.int32, (GROUPS, C), 0) * cs
    c_idxT = lax.broadcasted_iota(jnp.int32, (GROUPS, C), 1)
    gmT = ((c_idxT >= g_loT) & (c_idxT < g_loT + cs)).astype(jnp.float32)  # (32, C)

    csum = jnp.sum(h, axis=0, keepdims=True)            # (1, C)
    csq = jnp.sum(h * h, axis=0, keepdims=True)         # (1, C)
    stats = jnp.concatenate([csum, csq], axis=0)        # (2, C)
    grp = jnp.dot(stats, gm, preferred_element_type=jnp.float32)      # (2, 32) group sums
    grpc = jnp.dot(grp, gmT, preferred_element_type=jnp.float32)      # (2, C) expanded back
    mean = grpc[0:1, :] / n_per_group
    var = grpc[1:2, :] / n_per_group - mean * mean
    inv = lax.rsqrt(var + EPS)
    scale = inv * gamma                                  # fold GN affine into scale/shift
    shift = beta - mean * scale

    y = h * scale + shift
    y = y * jax.nn.sigmoid(y)                            # SiLU

    # ---- Conv3d (3,1,1), padding (1,0,0): one fused (L,3C)@(3C,C) matmul ----
    # out[t] = y[t-1]@W0 + y[t]@W1 + y[t+1]@W2 + bias, zero temporal padding.
    # Row shifts are static multiples of S (S % 8 == 0 keeps them sublane-aligned).
    zrows = jnp.zeros((S, C), jnp.float32)
    ypad = jnp.concatenate([zrows, y, zrows], axis=0)    # (L + 2S, C)
    yk = jnp.concatenate(
        [ypad[0:L], y, ypad[2 * S:2 * S + L]], axis=1)   # (L, 3C): [y[t-1] | y[t] | y[t+1]]
    wk = w_ref[0].astype(jnp.float32)                    # (3C, C): f32 operands (see FIX)
    out = jnp.dot(yk, wk, preferred_element_type=jnp.float32) + bias   # (L, C)

    # Single store per stage -- no read-modify-write of a VMEM accumulator.
    @pl.when(stage < last)
    def _():
        h_ref[...] = out

    @pl.when(stage == last)
    def _():
        o_ref[0] = (x_ref[0].astype(jnp.float32) + out).astype(o_ref.dtype)


def temporal_conv_block_channels_last(xk, gamma, beta, w, b):
    """xk: (B, T, S, C) channels-last, spatially flattened. Returns the same layout."""
    B, T, S, C = xk.shape
    assert C % GROUPS == 0, "GroupNorm(32, C) requires C % 32 == 0"
    L = T * S
    x2 = xk.reshape(B, L, C)

    # Conv weights (stage, kt, Cin, Cout) -> (stage, 3*Cin, Cout): the fused matmul
    # needs no in-kernel reshape.  bf16 storage halves weight HBM traffic / VMEM.
    w2 = w.reshape(4, 3 * C, C).astype(jnp.bfloat16)
    gamma3 = gamma.reshape(4, 1, C).astype(jnp.float32)
    beta3 = beta.reshape(4, 1, C).astype(jnp.float32)
    b3 = b.reshape(4, 1, C).astype(jnp.float32)

    # TODO(synk): whole-sample-resident design; for very large T*H*W*C (v7x 64 MiB
    # VMEM) chunk the GN/SiLU pass over row tiles and/or pass activations as bf16.
    # TODO(synk): for production C < 128, pad channels to 128 so the lane axis and
    # output stores are full-width (unmasked vst).
    out = pl.pallas_call(
        partial(_tcb_kernel, S=S),
        out_shape=jax.ShapeDtypeStruct((B, L, C), xk.dtype),
        grid_spec=pltpu.PrefetchScalarGridSpec(
            num_scalar_prefetch=0,
            grid=(B, 4),                               # stage axis innermost, sequential
            in_specs=[
                pl.BlockSpec((1, L, C), lambda bb, ss: (bb, 0, 0)),       # x
                pl.BlockSpec((1, 1, C), lambda bb, ss: (ss, 0, 0)),       # gamma (per stage)
                pl.BlockSpec((1, 1, C), lambda bb, ss: (ss, 0, 0)),       # beta
                pl.BlockSpec((1, 3 * C, C), lambda bb, ss: (ss, 0, 0)),   # conv weight
                pl.BlockSpec((1, 1, C), lambda bb, ss: (ss, 0, 0)),       # conv bias
            ],
            out_specs=pl.BlockSpec((1, L, C), lambda bb, ss: (bb, 0, 0)),
            scratch_shapes=[pltpu.VMEM((L, C), jnp.float32)],
        ),
        compiler_params=pltpu.CompilerParams(
            dimension_semantics=("parallel", "arbitrary"),
            vmem_limit_bytes=48 * 1024 * 1024,
        ),
    )(x2, gamma3, beta3, w2, b3)
    return out.reshape(B, T, S, C)


def temporal_conv_block(x, gamma, beta, w, b):
    """x: (B, C, T, H, W) like PyTorch NCDHW. Returns the same layout/dtype."""
    # TODO(synk): if the surrounding model can stay channels-last, call
    # temporal_conv_block_channels_last directly and skip these two HBM transposes.
    B, C, T, H, W = x.shape
    xk = jnp.transpose(x, (0, 2, 3, 4, 1)).reshape(B, T, H * W, C)
    out = temporal_conv_block_channels_last(xk, gamma, beta, w, b)
    return jnp.transpose(out.reshape(B, T, H, W, C), (0, 4, 1, 2, 3))


def ref_forward(x, gamma, beta, w, b):
    """Pure-JAX (f32) reference mirroring the PyTorch forward."""
    B, C, T, H, W = x.shape
    h = x
    for i in range(4):
        hg = h.reshape(B, GROUPS, C // GROUPS, T, H, W)
        mean = hg.mean(axis=(2, 3, 4, 5), keepdims=True)
        var = ((hg - mean) ** 2).mean(axis=(2, 3, 4, 5), keepdims=True)
        hn = ((hg - mean) / jnp.sqrt(var + EPS)).reshape(B, C, T, H, W)
        hh = hn * gamma[i].reshape(1, C, 1, 1, 1) + beta[i].reshape(1, C, 1, 1, 1)
        hh = hh * jax.nn.sigmoid(hh)
        hp = jnp.pad(hh, ((0, 0), (0, 0), (1, 1), (0, 0), (0, 0)))
        acc = jnp.zeros((B, C, T, H, W), jnp.float32)
        for kt in range(3):
            acc = acc + jnp.einsum('bcthw,cd->bdthw',
                                   hp[:, :, kt:kt + T], w[i, kt],
                                   preferred_element_type=jnp.float32)
        h = acc + b[i].reshape(1, C, 1, 1, 1)
    return x + h


def _check(out, ref, atol, rtol, name):
    err = float(jnp.max(jnp.abs(out - ref)))
    assert jnp.allclose(out, ref, atol=atol, rtol=rtol), f"{name}: max abs err {err}"


if __name__ == "__main__":
    key = jax.random.PRNGKey(0)
    B, C, T, H, W = 2, 64, 8, 4, 4   # C must be divisible by 32 for GroupNorm(32, C)
    k = jax.random.split(key, 8)
    x = jax.random.normal(k[0], (B, C, T, H, W), jnp.float32)

    # --- module parameters (deterministic, matching __init__ structure) ---
    gamma = jnp.ones((4, C), jnp.float32)          # GroupNorm affine defaults
    beta = jnp.zeros((4, C), jnp.float32)
    # Conv3d weights as (stage, kt, Cin, Cout); equals torch weight[co, ci, kt, 0, 0].T
    w = 0.05 * jax.random.normal(k[1], (4, 3, C, C), jnp.float32)
    b = 0.05 * jax.random.normal(k[2], (4, C), jnp.float32)
    w = w.at[3].set(0.0)                            # conv4 zero-initialized
    b = b.at[3].set(0.0)

    out = jax.block_until_ready(temporal_conv_block(x, gamma, beta, w, b))
    # Compare against a reference that uses the same bf16-rounded weights as the kernel.
    wq = w.astype(jnp.bfloat16).astype(jnp.float32)
    _check(out, ref_forward(x, gamma, beta, wq, b), 2e-2, 2e-2, "default")

    # Extra validation with non-trivial affine params and nonzero conv4.
    gamma_v = 1.0 + 0.1 * jax.random.normal(k[3], (4, C), jnp.float32)
    beta_v = 0.1 * jax.random.normal(k[4], (4, C), jnp.float32)
    w_v = 0.05 * jax.random.normal(k[5], (4, 3, C, C), jnp.float32)
    b_v = 0.05 * jax.random.normal(k[6], (4, C), jnp.float32)
    out_v = jax.block_until_ready(temporal_conv_block(x, gamma_v, beta_v, w_v, b_v))
    wq_v = w_v.astype(jnp.bfloat16).astype(jnp.float32)
    _check(out_v, ref_forward(x, gamma_v, beta_v, wq_v, b_v), 2e-2, 2e-2, "full")

    print("KERNEL_OK")
</pallas_src>

<mosaic_0001>
module attributes {stable_mosaic.version = 11 : i64} {
  func.func @_tcb_kernel(%arg0: i32, %arg1: i32, %arg2: memref<1x128x64xf32, #tpu.memory_space<vmem>>, %arg3: memref<1x1x64xf32, #tpu.memory_space<vmem>>, %arg4: memref<1x1x64xf32, #tpu.memory_space<vmem>>, %arg5: memref<1x192x64xbf16, #tpu.memory_space<vmem>>, %arg6: memref<1x1x64xf32, #tpu.memory_space<vmem>>, %arg7: memref<1x128x64xf32, #tpu.memory_space<vmem>>, %arg8: memref<128x64xf32, #tpu.memory_space<vmem>>) attributes {dimension_semantics = [#tpu.dimension_semantics<parallel>, #tpu.dimension_semantics<arbitrary>], iteration_bounds = array<i64: 2, 4>, scalar_prefetch = 0 : i64, scratch_operands = 1 : i64, tpu.core_type = #tpu.core_type<tc>, window_params = [{transform_indices = @transform_0, window_bounds = array<i64: 1, 128, 64>}, {transform_indices = @transform_1, window_bounds = array<i64: 1, 1, 64>}, {transform_indices = @transform_2, window_bounds = array<i64: 1, 1, 64>}, {transform_indices = @transform_3, window_bounds = array<i64: 1, 192, 64>}, {transform_indices = @transform_4, window_bounds = array<i64: 1, 1, 64>}, {transform_indices = @transform_5, window_bounds = array<i64: 1, 128, 64>}]} {
    %c0_i32 = arith.constant 0 : i32
    %0 = arith.cmpi eq, %arg1, %c0_i32 : i32
    %1 = arith.extui %0 : i1 to i32
    %c0_i32_0 = arith.constant 0 : i32
    %2 = arith.cmpi ne, %1, %c0_i32_0 : i32
    scf.if %2 {
      %c0_29 = arith.constant 0 : index
      %c0_30 = arith.constant 0 : index
      %c0_31 = arith.constant 0 : index
      %81 = vector.load %arg2[%c0_29, %c0_30, %c0_31] : memref<1x128x64xf32, #tpu.memory_space<vmem>>, vector<1x128x64xf32>
      %82 = vector.shape_cast %81 : vector<1x128x64xf32> to vector<128x64xf32>
      %c0_32 = arith.constant 0 : index
      %c0_33 = arith.constant 0 : index
      %83 = vector.load %arg8[%c0_32, %c0_33] : memref<128x64xf32, #tpu.memory_space<vmem>>, vector<128x64xf32>
      tpu.vector_store %arg8[%c0_32, %c0_33], %82 {strides = array<i32>} : memref<128x64xf32, #tpu.memory_space<vmem>>, vector<128x64xf32>,
    } else {
    }
    %c0 = arith.constant 0 : index
    %c0_1 = arith.constant 0 : index
    %3 = vector.load %arg8[%c0, %c0_1] : memref<128x64xf32, #tpu.memory_space<vmem>>, vector<128x64xf32>
    %c0_2 = arith.constant 0 : index
    %c0_3 = arith.constant 0 : index
    %c0_4 = arith.constant 0 : index
    %4 = vector.load %arg3[%c0_2, %c0_3, %c0_4] : memref<1x1x64xf32, #tpu.memory_space<vmem>>, vector<1x1x64xf32>
    %5 = vector.shape_cast %4 : vector<1x1x64xf32> to vector<1x64xf32>
    %c0_5 = arith.constant 0 : index
    %c0_6 = arith.constant 0 : index
    %c0_7 = arith.constant 0 : index
    %6 = vector.load %arg4[%c0_5, %c0_6, %c0_7] : memref<1x1x64xf32, #tpu.memory_space<vmem>>, vector<1x1x64xf32>
    %7 = vector.shape_cast %6 : vector<1x1x64xf32> to vector<1x64xf32>
    %c0_8 = arith.constant 0 : index
    %c0_9 = arith.constant 0 : index
    %c0_10 = arith.constant 0 : index
    %8 = vector.load %arg6[%c0_8, %c0_9, %c0_10] : memref<1x1x64xf32, #tpu.memory_space<vmem>>, vector<1x1x64xf32>
    %9 = vector.shape_cast %8 : vector<1x1x64xf32> to vector<1x64xf32>
    %10 = tpu.iota {dimensions = array<i32: 0>} : vector<64x32xi32>
    %11 = tpu.iota {dimensions = array<i32: 1>} : vector<64x32xi32>
    %c2_i32 = arith.constant 2 : i32
    %12 = vector.broadcast %c2_i32 : i32 to vector<64x32xi32>
    %13 = arith.muli %11, %12 : vector<64x32xi32>
    %14 = arith.cmpi sge, %10, %13 : vector<64x32xi32>
    %c2_i32_11 = arith.constant 2 : i32
    %15 = vector.broadcast %c2_i32_11 : i32 to vector<64x32xi32>
    %16 = arith.addi %13, %15 : vector<64x32xi32>
    %17 = arith.cmpi slt, %10, %16 : vector<64x32xi32>
    %18 = arith.andi %14, %17 : vector<64x32xi1>
    %19 = arith.extui %18 : vector<64x32xi1> to vector<64x32xi32>
    %20 = arith.sitofp %19 : vector<64x32xi32> to vector<64x32xf32>
    %21 = tpu.iota {dimensions = array<i32: 0>} : vector<32x64xi32>
    %c2_i32_12 = arith.constant 2 : i32
    %22 = vector.broadcast %c2_i32_12 : i32 to vector<32x64xi32>
    %23 = arith.muli %21, %22 : vector<32x64xi32>
    %24 = tpu.iota {dimensions = array<i32: 1>} : vector<32x64xi32>
    %25 = arith.cmpi sge, %24, %23 : vector<32x64xi32>
    %c2_i32_13 = arith.constant 2 : i32
    %26 = vector.broadcast %c2_i32_13 : i32 to vector<32x64xi32>
    %27 = arith.addi %23, %26 : vector<32x64xi32>
    %28 = arith.cmpi slt, %24, %27 : vector<32x64xi32>
    %29 = arith.andi %25, %28 : vector<32x64xi1>
    %30 = arith.extui %29 : vector<32x64xi1> to vector<32x64xi32>
    %31 = arith.sitofp %30 : vector<32x64xi32> to vector<32x64xf32>
    %cst = arith.constant dense<0.000000e+00> : vector<64xf32>
    %32 = vector.multi_reduction <add>, %3, %cst [0] : vector<128x64xf32> to vector<64xf32>
    %33 = vector.shape_cast %32 : vector<64xf32> to vector<1x64xf32>
    %34 = arith.mulf %3, %3 : vector<128x64xf32>
    %cst_14 = arith.constant dense<0.000000e+00> : vector<64xf32>
    %35 = vector.multi_reduction <add>, %34, %cst_14 [0] : vector<128x64xf32> to vector<64xf32>
    %36 = vector.shape_cast %35 : vector<64xf32> to vector<1x64xf32>
    %37 = tpu.concatenate %33, %36 in 0 : vector<1x64xf32>, vector<1x64xf32> -> vector<2x64xf32>
    %cst_15 = arith.constant dense<0.000000e+00> : vector<2x32xf32>
    %38 = tpu.matmul %37, %20, %cst_15 {dimension_numbers = #tpu.dot_dimension_numbers<[1], [0], [0], [1], [0, 0, 1, 1], [], []>} : vector<2x64xf32>, vector<64x32xf32>, vector<2x32xf32> -> vector<2x32xf32>
    %cst_16 = arith.constant dense<0.000000e+00> : vector<2x64xf32>
    %39 = tpu.matmul %38, %31, %cst_16 {dimension_numbers = #tpu.dot_dimension_numbers<[1], [0], [0], [1], [0, 0, 1, 1], [], []>} : vector<2x32xf32>, vector<32x64xf32>, vector<2x64xf32> -> vector<2x64xf32>
    %40 = vector.extract_strided_slice %39 {offsets = [0, 0], sizes = [1, 64], strides = [1, 1]} : vector<2x64xf32> to vector<1x64xf32>
    %cst_17 = arith.constant 2.560000e+02 : f32
    %41 = vector.broadcast %cst_17 : f32 to vector<1x64xf32>
    %42 = arith.divf %40, %41 : vector<1x64xf32>
    %43 = vector.extract_strided_slice %39 {offsets = [1, 0], sizes = [1, 64], strides = [1, 1]} : vector<2x64xf32> to vector<1x64xf32>
    %cst_18 = arith.constant 2.560000e+02 : f32
    %44 = vector.broadcast %cst_18 : f32 to vector<1x64xf32>
    %45 = arith.divf %43, %44 : vector<1x64xf32>
    %46 = arith.mulf %42, %42 : vector<1x64xf32>
    %47 = arith.subf %45, %46 : vector<1x64xf32>
    %cst_19 = arith.constant 9.99999974E-6 : f32
    %48 = vector.broadcast %cst_19 : f32 to vector<1x64xf32>
    %49 = arith.addf %47, %48 : vector<1x64xf32>
    %50 = math.rsqrt %49 : vector<1x64xf32>
    %51 = arith.mulf %50, %5 : vector<1x64xf32>
    %52 = arith.mulf %42, %51 : vector<1x64xf32>
    %53 = arith.subf %7, %52 : vector<1x64xf32>
    %54 = vector.broadcast %51 : vector<1x64xf32> to vector<128x64xf32>
    %55 = arith.mulf %3, %54 : vector<128x64xf32>
    %56 = vector.broadcast %53 : vector<1x64xf32> to vector<128x64xf32>
    %57 = arith.addf %55, %56 : vector<128x64xf32>
    %58 = arith.negf %57 : vector<128x64xf32>
    %59 = math.exp %58 : vector<128x64xf32>
    %cst_20 = arith.constant 1.000000e+00 : f32
    %60 = vector.broadcast %cst_20 : f32 to vector<128x64xf32>
    %61 = arith.addf %60, %59 : vector<128x64xf32>
    %62 = arith.divf %60, %61 : vector<128x64xf32>
    %63 = arith.mulf %57, %62 : vector<128x64xf32>
    %cst_21 = arith.constant 0.000000e+00 : f32
    %64 = vector.broadcast %cst_21 : f32 to vector<16x64xf32>
    %65 = tpu.concatenate %64, %63, %64 in 0 : vector<16x64xf32>, vector<128x64xf32>, vector<16x64xf32> -> vector<160x64xf32>
    %66 = vector.extract_strided_slice %65 {offsets = [0, 0], sizes = [128, 64], strides = [1, 1]} : vector<160x64xf32> to vector<128x64xf32>
    %67 = vector.extract_strided_slice %65 {offsets = [32, 0], sizes = [128, 64], strides = [1, 1]} : vector<160x64xf32> to vector<128x64xf32>
    %68 = tpu.concatenate %66, %63, %67 in 1 : vector<128x64xf32>, vector<128x64xf32>, vector<128x64xf32> -> vector<128x192xf32>
    %c0_22 = arith.constant 0 : index
    %c0_23 = arith.constant 0 : index
    %c0_24 = arith.constant 0 : index
    %69 = vector.load %arg5[%c0_22, %c0_23, %c0_24] : memref<1x192x64xbf16, #tpu.memory_space<vmem>>, vector<1x192x64xbf16>
    %70 = vector.shape_cast %69 : vector<1x192x64xbf16> to vector<192x64xbf16>
    %71 = arith.extf %70 : vector<192x64xbf16> to vector<192x64xf32>
    %cst_25 = arith.constant dense<0.000000e+00> : vector<128x64xf32>
    %72 = tpu.matmul %68, %71, %cst_25 {dimension_numbers = #tpu.dot_dimension_numbers<[1], [0], [0], [1], [0, 0, 1, 1], [], []>} : vector<128x192xf32>, vector<192x64xf32>, vector<128x64xf32> -> vector<128x64xf32>
    %73 = vector.broadcast %9 : vector<1x64xf32> to vector<128x64xf32>
    %74 = arith.addf %72, %73 : vector<128x64xf32>
    %c3_i32 = arith.constant 3 : i32
    %75 = arith.cmpi slt, %arg1, %c3_i32 : i32
    %76 = arith.extui %75 : i1 to i32
    %c0_i32_26 = arith.constant 0 : i32
    %77 = arith.cmpi ne, %76, %c0_i32_26 : i32
    scf.if %77 {
      %c0_29 = arith.constant 0 : index
      %c0_30 = arith.constant 0 : index
      %81 = vector.load %arg8[%c0_29, %c0_30] : memref<128x64xf32, #tpu.memory_space<vmem>>, vector<128x64xf32>
      tpu.vector_store %arg8[%c0_29, %c0_30], %74 {strides = array<i32>} : memref<128x64xf32, #tpu.memory_space<vmem>>, vector<128x64xf32>,
    } else {
    }
    %c3_i32_27 = arith.constant 3 : i32
    %78 = arith.cmpi eq, %arg1, %c3_i32_27 : i32
    %79 = arith.extui %78 : i1 to i32
    %c0_i32_28 = arith.constant 0 : i32
    %80 = arith.cmpi ne, %79, %c0_i32_28 : i32
    scf.if %80 {
      %c0_29 = arith.constant 0 : index
      %c0_30 = arith.constant 0 : index
      %c0_31 = arith.constant 0 : index
      %81 = vector.load %arg2[%c0_29, %c0_30, %c0_31] : memref<1x128x64xf32, #tpu.memory_space<vmem>>, vector<1x128x64xf32>
      %82 = vector.shape_cast %81 : vector<1x128x64xf32> to vector<128x64xf32>
      %83 = arith.addf %82, %74 : vector<128x64xf32>
      %c0_32 = arith.constant 0 : index
      %c0_33 = arith.constant 0 : index
      %c0_34 = arith.constant 0 : index
      %84 = vector.load %arg7[%c0_32, %c0_33, %c0_34] : memref<1x128x64xf32, #tpu.memory_space<vmem>>, vector<1x128x64xf32>
      %85 = vector.shape_cast %84 : vector<1x128x64xf32> to vector<128x64xf32>
      %86 = vector.shape_cast %83 : vector<128x64xf32> to vector<1x128x64xf32>
      tpu.vector_store %arg7[%c0_32, %c0_33, %c0_34], %86 {strides = array<i32>} : memref<1x128x64xf32, #tpu.memory_space<vmem>>, vector<1x128x64xf32>,
    } else {
    }
    return
  }
  func.func @transform_0(%arg0: i32, %arg1: i32) -> (i32, i32, i32) {
    %c0_i32 = arith.constant 0 : i32
    %c0_i32_0 = arith.constant 0 : i32
    %c0_i32_1 = arith.constant 0 : i32
    return %arg0, %c0_i32, %c0_i32_0 : i32, i32, i32
  }
  func.func @transform_1(%arg0: i32, %arg1: i32) -> (i32, i32, i32) {
    %c0_i32 = arith.constant 0 : i32
    %c0_i32_0 = arith.constant 0 : i32
    %c0_i32_1 = arith.constant 0 : i32
    return %arg1, %c0_i32, %c0_i32_0 : i32, i32, i32
  }
  func.func @transform_2(%arg0: i32, %arg1: i32) -> (i32, i32, i32) {
    %c0_i32 = arith.constant 0 : i32
    %c0_i32_0 = arith.constant 0 : i32
    %c0_i32_1 = arith.constant 0 : i32
    return %arg1, %c0_i32, %c0_i32_0 : i32, i32, i32
  }
  func.func @transform_3(%arg0: i32, %arg1: i32) -> (i32, i32, i32) {
    %c0_i32 = arith.constant 0 : i32
    %c0_i32_0 = arith.constant 0 : i32
    %c0_i32_1 = arith.constant 0 : i32
    return %arg1, %c0_i32, %c0_i32_0 : i32, i32, i32
  }
  func.func @transform_4(%arg0: i32, %arg1: i32) -> (i32, i32, i32) {
    %c0_i32 = arith.constant 0 : i32
    %c0_i32_0 = arith.constant 0 : i32
    %c0_i32_1 = arith.constant 0 : i32
    return %arg1, %c0_i32, %c0_i32_0 : i32, i32, i32
  }
  func.func @transform_5(%arg0: i32, %arg1: i32) -> (i32, i32, i32) {
    %c0_i32 = arith.constant 0 : i32
    %c0_i32_0 = arith.constant 0 : i32
    %c0_i32_1 = arith.constant 0 : i32
    return %arg0, %c0_i32, %c0_i32_0 : i32, i32, i32
  }
}

</mosaic_0001>

<llo_original>
// kernel: tpu_custom_call.1
$region0: #{tpu_custom_call.1}
  #allocation0 [shape = 'u32[]', space=smem, size = 0x4, offset = 0x4, fixed_abs, tag = 'smem constant byte address 0x4 - core index']
  #allocation1 [shape = 'u32[144,128]{1,0:T(1,128)}', space=vmem, size = 0x12000, scoped, tag = 'internal scratch']
  #allocation2 [shape = 'f32[128,64]{1,0:T(8,128)}', space=vmem, size = 0x10000, scoped, tag = 'scratch operand']
  %s0 = inlined_call_operand.vmem [shape: f32[2,128,64], index: 0, kind: input, shape index: {}]
  %s1 = inlined_call_operand.vmem [shape: f32[4,1,64], index: 1, kind: input, shape index: {}]
  %s2 = inlined_call_operand.vmem [shape: f32[4,1,64], index: 2, kind: input, shape index: {}]
  %s3 = inlined_call_operand.vmem [shape: bf16[4,192,64], index: 3, kind: input, shape index: {}]
  %s4 = inlined_call_operand.vmem [shape: f32[4,1,64], index: 4, kind: input, shape index: {}]
  %s5 = inlined_call_operand.vmem [shape: f32[2,128,64], index: 5, kind: output, shape index: {}]
  %s6 = sld [smem:[#allocation0]]
  $region65: #{tpu_custom_call.1} parent=0
    _
  %s8 = ssub.s32 1, %s6
  %s9 = scalar_select 0, %s8, %s6
  loop: start=0, step=1, limit=10
  $region2: #{tpu_custom_call.1} parent=0 // loop_pre_header
    _
  $region3: #{tpu_custom_call.1} parent=0 // loop_header
    %s11 = sphi 0, %s15
    %p12 = scmp.ge.s32.totalorder %s11, 10
    %s18 = sphi 0, %s30
    %s19 = sphi 0, %s26
    %s20 = sphi 0, %s18
    %s21 = sphi 0, %s19
    %s22 = sphi 0, %s20
    %s23 = sphi 0, %s21
    %s33 = sphi 0, %s35
    %s36 = sphi 0, %s33
    %s37 = sphi 0, %s36
    %s53 = sphi 0, %s37
    %s59 = sphi 0, %s61
    %s62 = sphi 0, %s59
    %s63 = sphi 0, %s62
    %s79 = sphi 0, %s63
    %s85 = sphi 0, %s87
    %s88 = sphi 0, %s85
    %s89 = sphi 0, %s88
    %s105 = sphi 0, %s89
    %s111 = sphi 0, %s113
    %s114 = sphi 0, %s111
    %s115 = sphi 0, %s114
    %s131 = sphi 0, %s115
    %s137 = sphi 0, %s139
    %s140 = sphi 0, %s137
    %s141 = sphi 0, %s140
    %s157 = sphi 0, %s141
    %s163 = sphi 0, %s165
    %s166 = sphi 0, %s163
    %s167 = sphi 0, %s166
    %s183 = sphi 0, %s167
  $region4: #{tpu_custom_call.1} parent=0 // loop_header_branch
    %14 = sbr.rel (%p12) target = $region8
  $region5: #{tpu_custom_call.1} parent=0 // loop_body
    %s16 = ssub.s32 %s11, 1
    %s17 = ssub.s32 %s11, 2
    %s24 = sadd.s32 1, %s19
    %p25 = scmp.ge.s32.totalorder %s24, 4
    %s26 = scalar_select %p25, 0, %s24
    %s27 = sadd.s32 1, %s18
    %s28 = scalar_select %p25, %s27, %s18
    %p29 = scmp.ge.s32.totalorder %s28, 2
    %s30 = scalar_select %p29, 0, %s28
    %s31 = ssub.s32 %s18, %s30
    %p32 = scmp.eq.s32.totalorder %s31, 0
    %s34 = sadd.s32 %s33, 1
    %s35 = scalar_select %p32, %s33, %s34
    %p38 = pneg %p32
    %p39 = scmp.eq.s32.totalorder %s11, 7
    %p40 = por %p38, %p39
    %p41 = scmp.ne.s32.totalorder %s33, %s36
    %p42 = scmp.eq.s32.totalorder %s11, 0
    %p43 = por %p41, %p42
    %p44 = scmp.ne.s32.totalorder %s33, %s36
    %p45 = scmp.eq.s32.totalorder %s16, 7
    %p46 = por %p44, %p45
    %p47 = scmp.ne.s32.totalorder %s36, %s37
    %p48 = scmp.eq.s32.totalorder %s16, 0
    %p49 = por %p47, %p48
    %p50 = scmp.ne.s32.totalorder %s36, %s37
    %p51 = scmp.eq.s32.totalorder %s17, 7
    %p52 = por %p50, %p51
    %p54 = scmp.ne.s32.totalorder %s37, %s53
    %p55 = scmp.eq.s32.totalorder %s17, 0
    %p56 = por %p54, %p55
    %s57 = ssub.s32 %s19, %s26
    %p58 = scmp.eq.s32.totalorder %s57, 0
    %s60 = sadd.s32 %s59, 1
    %s61 = scalar_select %p58, %s59, %s60
    %p64 = pneg %p58
    %p65 = scmp.eq.s32.totalorder %s11, 7
    %p66 = por %p64, %p65
    %p67 = scmp.ne.s32.totalorder %s59, %s62
    %p68 = scmp.eq.s32.totalorder %s11, 0
    %p69 = por %p67, %p68
    %p70 = scmp.ne.s32.totalorder %s59, %s62
    %p71 = scmp.eq.s32.totalorder %s16, 7
    %p72 = por %p70, %p71
    %p73 = scmp.ne.s32.totalorder %s62, %s63
    %p74 = scmp.eq.s32.totalorder %s16, 0
    %p75 = por %p73, %p74
    %p76 = scmp.ne.s32.totalorder %s62, %s63
    %p77 = scmp.eq.s32.totalorder %s17, 7
    %p78 = por %p76, %p77
    %p80 = scmp.ne.s32.totalorder %s63, %s79
    %p81 = scmp.eq.s32.totalorder %s17, 0
    %p82 = por %p80, %p81
    %s83 = ssub.s32 %s19, %s26
    %p84 = scmp.eq.s32.totalorder %s83, 0
    %s86 = sadd.s32 %s85, 1
    %s87 = scalar_select %p84, %s85, %s86
    %p90 = pneg %p84
    %p91 = scmp.eq.s32.totalorder %s11, 7
    %p92 = por %p90, %p91
    %p93 = scmp.ne.s32.totalorder %s85, %s88
    %p94 = scmp.eq.s32.totalorder %s11, 0
    %p95 = por %p93, %p94
    %p96 = scmp.ne.s32.totalorder %s85, %s88
    %p97 = scmp.eq.s32.totalorder %s16, 7
    %p98 = por %p96, %p97
    %p99 = scmp.ne.s32.totalorder %s88, %s89
    %p100 = scmp.eq.s32.totalorder %s16, 0
    %p101 = por %p99, %p100
    %p102 = scmp.ne.s32.totalorder %s88, %s89
    %p103 = scmp.eq.s32.totalorder %s17, 7
    %p104 = por %p102, %p103
    %p106 = scmp.ne.s32.totalorder %s89, %s105
    %p107 = scmp.eq.s32.totalorder %s17, 0
    %p108 = por %p106, %p107
    %s109 = ssub.s32 %s19, %s26
    %p110 = scmp.eq.s32.totalorder %s109, 0
    %s112 = sadd.s32 %s111, 1
    %s113 = scalar_select %p110, %s111, %s112
    %p116 = pneg %p110
    %p117 = scmp.eq.s32.totalorder %s11, 7
    %p118 = por %p116, %p117
    %p119 = scmp.ne.s32.totalorder %s111, %s114
    %p120 = scmp.eq.s32.totalorder %s11, 0
    %p121 = por %p119, %p120
    %p122 = scmp.ne.s32.totalorder %s111, %s114
    %p123 = scmp.eq.s32.totalorder %s16, 7
    %p124 = por %p122, %p123
    %p125 = scmp.ne.s32.totalorder %s114, %s115
    %p126 = scmp.eq.s32.totalorder %s16, 0
    %p127 = por %p125, %p126
    %p128 = scmp.ne.s32.totalorder %s114, %s115
    %p129 = scmp.eq.s32.totalorder %s17, 7
    %p130 = por %p128, %p129
    %p132 = scmp.ne.s32.totalorder %s115, %s131
    %p133 = scmp.eq.s32.totalorder %s17, 0
    %p134 = por %p132, %p133
    %s135 = ssub.s32 %s19, %s26
    %p136 = scmp.eq.s32.totalorder %s135, 0
    %s138 = sadd.s32 %s137, 1
    %s139 = scalar_select %p136, %s137, %s138
    %p142 = pneg %p136
    %p143 = scmp.eq.s32.totalorder %s11, 7
    %p144 = por %p142, %p143
    %p145 = scmp.ne.s32.totalorder %s137, %s140
    %p146 = scmp.eq.s32.totalorder %s11, 0
    %p147 = por %p145, %p146
    %p148 = scmp.ne.s32.totalorder %s137, %s140
    %p149 = scmp.eq.s32.totalorder %s16, 7
    %p150 = por %p148, %p149
    %p151 = scmp.ne.s32.totalorder %s140, %s141
    %p152 = scmp.eq.s32.totalorder %s16, 0
    %p153 = por %p151, %p152
    %p154 = scmp.ne.s32.totalorder %s140, %s141
    %p155 = scmp.eq.s32.totalorder %s17, 7
    %p156 = por %p154, %p155
    %p158 = scmp.ne.s32.totalorder %s141, %s157
    %p159 = scmp.eq.s32.totalorder %s17, 0
    %p160 = por %p158, %p159
    %s161 = ssub.s32 %s18, %s30
    %p162 = scmp.eq.s32.totalorder %s161, 0
    %s164 = sadd.s32 %s163, 1
    %s165 = scalar_select %p162, %s163, %s164
    %p168 = pneg %p162
    %p169 = scmp.eq.s32.totalorder %s11, 7
    %p170 = por %p168, %p169
    %p171 = scmp.ne.s32.totalorder %s163, %s166
    %p172 = scmp.eq.s32.totalorder %s11, 0
    %p173 = por %p171, %p172
    %p174 = scmp.ne.s32.totalorder %s163, %s166
    %p175 = scmp.eq.s32.totalorder %s16, 7
    %p176 = por %p174, %p175
    %p177 = scmp.ne.s32.totalorder %s166, %s167
    %p178 = scmp.eq.s32.totalorder %s16, 0
    %p179 = por %p177, %p178
    %p180 = scmp.ne.s32.totalorder %s166, %s167
    %p181 = scmp.eq.s32.totalorder %s17, 7
    %p182 = por %p180, %p181
    %p184 = scmp.ne.s32.totalorder %s167, %s183
    %p185 = scmp.eq.s32.totalorder %s17, 0
    %p186 = por %p184, %p185
    %p187 = scmp.le.s32.totalorder 1, %s11
    %p188 = scmp.lt.s32.totalorder %s11, 9
    %p189 = pnand %p187, %p188
    %p190 = pneg %p189
    // Predicated region
    $region9: #{tpu_custom_call.1} parent=5 // pred_check
      _
    $region10: #{tpu_custom_call.1} parent=5 // pred_check_branch
      %192 = sbr.rel (%p189) target = $region12
    $region11: #{tpu_custom_call.1} parent=5 // pred_region
      %s193 = ssub.s32 %s11, 1
    $region12: #{tpu_custom_call.1} parent=5 // pred_fallthru
      _
    %p194 = scmp.lt.s32.totalorder %s11, 8
    // Predicated region
    $region13: #{tpu_custom_call.1} parent=5 // pred_check
      %p195 = pneg %p194
    $region14: #{tpu_custom_call.1} parent=5 // pred_check_branch
      %197 = sbr.rel (%p195) target = $region16
    $region15: #{tpu_custom_call.1} parent=5 // pred_region
      // Predicated region
      $region17: #{tpu_custom_call.1} parent=15 // pred_check
        %p198 = pneg %p43
      $region18: #{tpu_custom_call.1} parent=15 // pred_check_branch
        %200 = sbr.rel (%p198) target = $region20
      $region19: #{tpu_custom_call.1} parent=15 // pred_region
        %p201 = scmp.lt.s32.totalorder %s18, 1
        %s202 = scalar_select %p201, %s18, 1
        %s203 = smul.addr %s202, 16
        %s204 = smul.addr %s203, 8
        %s205 = scalar_lea.vmem %s0, %s204
      $region20: #{tpu_custom_call.1} parent=15 // pred_fallthru
        _
      // Predicated region
      $region21: #{tpu_custom_call.1} parent=15 // pred_check
        %p206 = pneg %p69
      $region22: #{tpu_custom_call.1} parent=15 // pred_check_branch
        %208 = sbr.rel (%p206) target = $region24
      $region23: #{tpu_custom_call.1} parent=15 // pred_region
        %p209 = scmp.lt.s32.totalorder %s19, 3
        %s210 = scalar_select %p209, %s19, 3
        %s211 = scalar_lea.vmem %s1, %s210
      $region24: #{tpu_custom_call.1} parent=15 // pred_fallthru
        _
      // Predicated region
      $region25: #{tpu_custom_call.1} parent=15 // pred_check
        %p212 = pneg %p95
      $region26: #{tpu_custom_call.1} parent=15 // pred_check_branch
        %214 = sbr.rel (%p212) target = $region28
      $region27: #{tpu_custom_call.1} parent=15 // pred_region
        %p215 = scmp.lt.s32.totalorder %s19, 3
        %s216 = scalar_select %p215, %s19, 3
        %s217 = scalar_lea.vmem %s2, %s216
      $region28: #{tpu_custom_call.1} parent=15 // pred_fallthru
        _
      // Predicated region
      $region29: #{tpu_custom_call.1} parent=15 // pred_check
        %p218 = pneg %p121
      $region30: #{tpu_custom_call.1} parent=15 // pred_check_branch
        %220 = sbr.rel (%p218) target = $region32
      $region31: #{tpu_custom_call.1} parent=15 // pred_region
        %p221 = scmp.lt.s32.totalorder %s19, 3
        %s222 = scalar_select %p221, %s19, 3
        %s223 = smul.addr %s222, 24
        %s224 = smul.addr %s223, 4
        %s225 = scalar_lea.vmem %s3, %s224
      $region32: #{tpu_custom_call.1} parent=15 // pred_fallthru
        _
      // Predicated region
      $region33: #{tpu_custom_call.1} parent=15 // pred_check
        %p226 = pneg %p147
      $region34: #{tpu_custom_call.1} parent=15 // pred_check_branch
        %228 = sbr.rel (%p226) target = $region36
      $region35: #{tpu_custom_call.1} parent=15 // pred_region
        %p229 = scmp.lt.s32.totalorder %s19, 3
        %s230 = scalar_select %p229, %s19, 3
        %s231 = scalar_lea.vmem %s4, %s230
      $region36: #{tpu_custom_call.1} parent=15 // pred_fallthru
        _
    $region16: #{tpu_custom_call.1} parent=5 // pred_fallthru
      _
    %p232 = scmp.le.s32.totalorder 1, %s11
    %p233 = scmp.lt.s32.totalorder %s11, 9
    %p234 = pnand %p232, %p233
    %p235 = pneg %p234
    // Predicated region
    $region37: #{tpu_custom_call.1} parent=5 // pred_check
      _
    $region38: #{tpu_custom_call.1} parent=5 // pred_check_branch
      %237 = sbr.rel (%p234) target = $region40
    $region39: #{tpu_custom_call.1} parent=5 // pred_region
      %s238 = ssub.s32 %s11, 1
      %p239 = scmp.lt.s32.totalorder %s20, 1
      %s240 = scalar_select %p239, %s20, 1
      %s241 = smul.addr %s240, 16
      %s242 = smul.addr %s241, 8
      %s243 = scalar_lea.vmem %s0, %s242
      %p244 = pneg %p49
      %p245 = pneg %p46
      %p246 = scmp.lt.s32.totalorder %s21, 3
      %s247 = scalar_select %p246, %s21, 3
      %s248 = scalar_lea.vmem %s1, %s247
      %p249 = pneg %p75
      %p250 = pneg %p72
      %p251 = scmp.lt.s32.totalorder %s21, 3
      %s252 = scalar_select %p251, %s21, 3
      %s253 = scalar_lea.vmem %s2, %s252
      %p254 = pneg %p101
      %p255 = pneg %p98
      %p256 = scmp.lt.s32.totalorder %s21, 3
      %s257 = scalar_select %p256, %s21, 3
      %s258 = smul.addr %s257, 24
      %s259 = smul.addr %s258, 4
      %s260 = scalar_lea.vmem %s3, %s259
      %p261 = pneg %p127
      %p262 = pneg %p124
      %p263 = scmp.lt.s32.totalorder %s21, 3
      %s264 = scalar_select %p263, %s21, 3
      %s265 = scalar_lea.vmem %s4, %s264
      %p266 = pneg %p153
      %p267 = pneg %p150
      %p268 = pneg %p179
      %p269 = pneg %p176
      %p270 = scmp.lt.s32.totalorder %s20, 1
      %s271 = scalar_select %p270, %s20, 1
      %s272 = smul.addr %s271, 16
      %s273 = smul.addr %s272, 8
      %s274 = scalar_lea.vmem %s5, %s273
      %p275 = scmp.lt.s32.totalorder %s20, 1
      %s276 = scalar_select %p275, %s20, 1
      %s277 = smul.addr %s276, 16
      %s278 = smul.addr %s277, 8
      %s279 = scalar_lea.vmem %s0, %s278
      %p280 = scmp.lt.s32.totalorder %s21, 3
      %s281 = scalar_select %p280, %s21, 3
      %s282 = scalar_lea.vmem %s1, %s281
      %p283 = scmp.lt.s32.totalorder %s21, 3
      %s284 = scalar_select %p283, %s21, 3
      %s285 = scalar_lea.vmem %s2, %s284
      %p286 = scmp.lt.s32.totalorder %s21, 3
      %s287 = scalar_select %p286, %s21, 3
      %s288 = smul.addr %s287, 24
      %s289 = smul.addr %s288, 4
      %s290 = scalar_lea.vmem %s3, %s289
      %p291 = scmp.lt.s32.totalorder %s21, 3
      %s292 = scalar_select %p291, %s21, 3
      %s293 = scalar_lea.vmem %s4, %s292
      %p294 = scmp.lt.s32.totalorder %s20, 1
      %s295 = scalar_select %p294, %s20, 1
      %s296 = smul.addr %s295, 16
      %s297 = smul.addr %s296, 8
      %s298 = scalar_lea.vmem %s5, %s297
      %p299 = scmp.eq.s32.totalorder %s21, 0
      // Predicated region
      $region41: #{tpu_custom_call.1} parent=39 // pred_check
        %p300 = pneg %p299
      $region42: #{tpu_custom_call.1} parent=39 // pred_check_branch
        %302 = sbr.rel (%p300) target = $region44
      $region43: #{tpu_custom_call.1} parent=39 // pred_region
        %v303 = vld [vmem:[%s279] sm:$0xff]
        %v304 = vld [vmem:[%s279 + $0x8] sm:$0xff]
        %v305 = vld [vmem:[%s279 + $0x10] sm:$0xff]
        %v306 = vld [vmem:[%s279 + $0x18] sm:$0xff]
        %v307 = vld [vmem:[%s279 + $0x20] sm:$0xff]
        %v308 = vld [vmem:[%s279 + $0x28] sm:$0xff]
        %v309 = vld [vmem:[%s279 + $0x30] sm:$0xff]
        %v310 = vld [vmem:[%s279 + $0x38] sm:$0xff]
        %v311 = vld [vmem:[%s279 + $0x40] sm:$0xff]
        %v312 = vld [vmem:[%s279 + $0x48] sm:$0xff]
        %v313 = vld [vmem:[%s279 + $0x50] sm:$0xff]
        %v314 = vld [vmem:[%s279 + $0x58] sm:$0xff]
        %v315 = vld [vmem:[%s279 + $0x60] sm:$0xff]
        %v316 = vld [vmem:[%s279 + $0x68] sm:$0xff]
        %v317 = vld [vmem:[%s279 + $0x70] sm:$0xff]
        %v318 = vld [vmem:[%s279 + $0x78] sm:$0xff]
        %vm319 = vcmask 523264
        %320 = vst.msk [vmem:[#allocation2] sm:$0xff] %vm319, %v303
        %321 = vst.msk [vmem:[#allocation2 + $0x8] sm:$0xff] %vm319, %v304
        %322 = vst.msk [vmem:[#allocation2 + $0x10] sm:$0xff] %vm319, %v305
        %323 = vst.msk [vmem:[#allocation2 + $0x18] sm:$0xff] %vm319, %v306
        %324 = vst.msk [vmem:[#allocation2 + $0x20] sm:$0xff] %vm319, %v307
        %325 = vst.msk [vmem:[#allocation2 + $0x28] sm:$0xff] %vm319, %v308
        %326 = vst.msk [vmem:[#allocation2 + $0x30] sm:$0xff] %vm319, %v309
        %327 = vst.msk [vmem:[#allocation2 + $0x38] sm:$0xff] %vm319, %v310
        %328 = vst.msk [vmem:[#allocation2 + $0x40] sm:$0xff] %vm319, %v311
        %329 = vst.msk [vmem:[#allocation2 + $0x48] sm:$0xff] %vm319, %v312
        %330 = vst.msk [vmem:[#allocation2 + $0x50] sm:$0xff] %vm319, %v313
        %331 = vst.msk [vmem:[#allocation2 + $0x58] sm:$0xff] %vm319, %v314
        %332 = vst.msk [vmem:[#allocation2 + $0x60] sm:$0xff] %vm319, %v315
        %333 = vst.msk [vmem:[#allocation2 + $0x68] sm:$0xff] %vm319, %v316
        %334 = vst.msk [vmem:[#allocation2 + $0x70] sm:$0xff] %vm319, %v317
        %335 = vst.msk [vmem:[#allocation2 + $0x78] sm:$0xff] %vm319, %v318
      $region44: #{tpu_custom_call.1} parent=39 // pred_fallthru
        _
      %v336 = vld [vmem:[#allocation2] sm:$0xff]
      %v337 = vld [vmem:[#allocation2 + $0x8] sm:$0xff]
      %v338 = vld [vmem:[#allocation2 + $0x10] sm:$0xff]
      %v339 = vld [vmem:[#allocation2 + $0x18] sm:$0xff]
      %v340 = vld [vmem:[#allocation2 + $0x20] sm:$0xff]
      %v341 = vld [vmem:[#allocation2 + $0x28] sm:$0xff]
      %v342 = vld [vmem:[#allocation2 + $0x30] sm:$0xff]
      %v343 = vld [vmem:[#allocation2 + $0x38] sm:$0xff]
      %v344 = vld [vmem:[#allocation2 + $0x40] sm:$0xff]
      %v345 = vld [vmem:[#allocation2 + $0x48] sm:$0xff]
      %v346 = vld [vmem:[#allocation2 + $0x50] sm:$0xff]
      %v347 = vld [vmem:[#allocation2 + $0x58] sm:$0xff]
      %v348 = vld [vmem:[#allocation2 + $0x60] sm:$0xff]
      %v349 = vld [vmem:[#allocation2 + $0x68] sm:$0xff]
      %v350 = vld [vmem:[#allocation2 + $0x70] sm:$0xff]
      %v351 = vld [vmem:[#allocation2 + $0x78] sm:$0xff]
      %v352 = vld [vmem:[%s282] sm:$0x1]
      %v353 = vld [vmem:[%s285] sm:$0x1]
      %v354 = vld [vmem:[%s293] sm:$0x1]
      %v355 = vlaneseq
      %v356 = vshrl.u32 %v355, 7
      %v357 = vadd.s32 %v356, 8
      %v358 = vadd.s32 %v356, 16
      %v359 = vadd.s32 %v356, 24
      %v360 = vadd.s32 %v356, 32
      %v361 = vadd.s32 %v356, 40
      %v362 = vadd.s32 %v356, 48
      %v363 = vadd.s32 %v356, 56
      %v364 = vlaneseq
      %v365 = vand.u32 %v364, 127
      %v366 = vmul.u32 %v365, 2
      %vm367 = vcmp.ge.s32.totalorder %v356, %v366
      %vm368 = vcmp.ge.s32.totalorder %v357, %v366
      %vm369 = vcmp.ge.s32.totalorder %v358, %v366
      %vm370 = vcmp.ge.s32.totalorder %v359, %v366
      %vm371 = vcmp.ge.s32.totalorder %v360, %v366
      %vm372 = vcmp.ge.s32.totalorder %v361, %v366
      %vm373 = vcmp.ge.s32.totalorder %v362, %v366
      %vm374 = vcmp.ge.s32.totalorder %v363, %v366
      %v375 = vadd.s32 %v366, 2
      %vm376 = vcmp.lt.s32.totalorder %v356, %v375
      %vm377 = vcmp.lt.s32.totalorder %v357, %v375
      %vm378 = vcmp.lt.s32.totalorder %v358, %v375
      %vm379 = vcmp.lt.s32.totalorder %v359, %v375
      %vm380 = vcmp.lt.s32.totalorder %v360, %v375
      %vm381 = vcmp.lt.s32.totalorder %v361, %v375
      %vm382 = vcmp.lt.s32.totalorder %v362, %v375
      %vm383 = vcmp.lt.s32.totalorder %v363, %v375
      %vm384 = vmand %vm367, %vm376
      %vm385 = vmand %vm368, %vm377
      %vm386 = vmand %vm369, %vm378
      %vm387 = vmand %vm370, %vm379
      %vm388 = vmand %vm371, %vm380
      %vm389 = vmand %vm372, %vm381
      %vm390 = vmand %vm373, %vm382
      %vm391 = vmand %vm374, %vm383
      %v392 = vsel %vm384, 1, 0
      %v393 = vsel %vm385, 1, 0
      %v394 = vsel %vm386, 1, 0
      %v395 = vsel %vm387, 1, 0
      %v396 = vsel %vm388, 1, 0
      %v397 = vsel %vm389, 1, 0
      %v398 = vsel %vm390, 1, 0
      %v399 = vsel %vm391, 1, 0
      %v400 = vcvt.s32.f32 %v392
      %v401 = vcvt.s32.f32 %v393
      %v402 = vcvt.s32.f32 %v394
      %v403 = vcvt.s32.f32 %v395
      %v404 = vcvt.s32.f32 %v396
      %v405 = vcvt.s32.f32 %v397
      %v406 = vcvt.s32.f32 %v398
      %v407 = vcvt.s32.f32 %v399
      %v408 = vmul.u32 %v356, 2
      %v409 = vmul.u32 %v357, 2
      %v410 = vmul.u32 %v358, 2
      %v411 = vmul.u32 %v359, 2
      %vm412 = vcmp.ge.s32.totalorder %v365, %v408
      %vm413 = vcmp.ge.s32.totalorder %v365, %v409
      %vm414 = vcmp.ge.s32.totalorder %v365, %v410
      %vm415 = vcmp.ge.s32.totalorder %v365, %v411
      %v416 = vadd.s32 %v408, 2
      %v417 = vadd.s32 %v409, 2
      %v418 = vadd.s32 %v410, 2
      %v419 = vadd.s32 %v411, 2
      %vm420 = vcmp.lt.s32.totalorder %v365, %v416
      %vm421 = vcmp.lt.s32.totalorder %v365, %v417
      %vm422 = vcmp.lt.s32.totalorder %v365, %v418
      %vm423 = vcmp.lt.s32.totalorder %v365, %v419
      %vm424 = vmand %vm412, %vm420
      %vm425 = vmand %vm413, %vm421
      %vm426 = vmand %vm414, %vm422
      %vm427 = vmand %vm415, %vm423
      %v428 = vsel %vm424, 1, 0
      %v429 = vsel %vm425, 1, 0
      %v430 = vsel %vm426, 1, 0
      %v431 = vsel %vm427, 1, 0
      %v432 = vcvt.s32.f32 %v428
      %v433 = vcvt.s32.f32 %v429
      %v434 = vcvt.s32.f32 %v430
      %v435 = vcvt.s32.f32 %v431
      %vm436 = vcmask 523264
      %v437 = vsel %vm436, %v336, 0.0
      %v438 = vsel %vm436, %v337, 0.0
      %v439 = vadd.f32 %v437, %v438
      %v440 = vsel %vm436, %v338, 0.0
      %v441 = vadd.f32 %v439, %v440
      %v442 = vsel %vm436, %v339, 0.0
      %v443 = vadd.f32 %v441, %v442
      %v444 = vsel %vm436, %v340, 0.0
      %v445 = vadd.f32 %v443, %v444
      %v446 = vsel %vm436, %v341, 0.0
      %v447 = vadd.f32 %v445, %v446
      %v448 = vsel %vm436, %v342, 0.0
      %v449 = vadd.f32 %v447, %v448
      %v450 = vsel %vm436, %v343, 0.0
      %v451 = vadd.f32 %v449, %v450
      %v452 = vsel %vm436, %v344, 0.0
      %v453 = vadd.f32 %v451, %v452
      %v454 = vsel %vm436, %v345, 0.0
      %v455 = vadd.f32 %v453, %v454
      %v456 = vsel %vm436, %v346, 0.0
      %v457 = vadd.f32 %v455, %v456
      %v458 = vsel %vm436, %v347, 0.0
      %v459 = vadd.f32 %v457, %v458
      %v460 = vsel %vm436, %v348, 0.0
      %v461 = vadd.f32 %v459, %v460
      %v462 = vsel %vm436, %v349, 0.0
      %v463 = vadd.f32 %v461, %v462
      %v464 = vsel %vm436, %v350, 0.0
      %v465 = vadd.f32 %v463, %v464
      %v466 = vsel %vm436, %v351, 0.0
      %v467 = vadd.f32 %v465, %v466
      %v468 = vrot.slane %v467, 4
      %v469 = vadd.f32 %v467, %v468
      %v470 = vrot.slane %v469, 2
      %v471 = vadd.f32 %v469, %v470
      %v472 = vrot.slane %v471, 1
      %v473 = vadd.f32 %v471, %v472
      %v474 = vmul.f32 %v336, %v336
      %v475 = vmul.f32 %v337, %v337
      %v476 = vmul.f32 %v338, %v338
      %v477 = vmul.f32 %v339, %v339
      %v478 = vmul.f32 %v340, %v340
      %v479 = vmul.f32 %v341, %v341
      %v480 = vmul.f32 %v342, %v342
      %v481 = vmul.f32 %v343, %v343
      %v482 = vmul.f32 %v344, %v344
      %v483 = vmul.f32 %v345, %v345
      %v484 = vmul.f32 %v346, %v346
      %v485 = vmul.f32 %v347, %v347
      %v486 = vmul.f32 %v348, %v348
      %v487 = vmul.f32 %v349, %v349
      %v488 = vmul.f32 %v350, %v350
      %v489 = vmul.f32 %v351, %v351
      %v490 = vsel %vm436, %v474, 0.0
      %v491 = vsel %vm436, %v475, 0.0
      %v492 = vadd.f32 %v490, %v491
      %v493 = vsel %vm436, %v476, 0.0
      %v494 = vadd.f32 %v492, %v493
      %v495 = vsel %vm436, %v477, 0.0
      %v496 = vadd.f32 %v494, %v495
      %v497 = vsel %vm436, %v478, 0.0
      %v498 = vadd.f32 %v496, %v497
      %v499 = vsel %vm436, %v479, 0.0
      %v500 = vadd.f32 %v498, %v499
      %v501 = vsel %vm436, %v480, 0.0
      %v502 = vadd.f32 %v500, %v501
      %v503 = vsel %vm436, %v481, 0.0
      %v504 = vadd.f32 %v502, %v503
      %v505 = vsel %vm436, %v482, 0.0
      %v506 = vadd.f32 %v504, %v505
      %v507 = vsel %vm436, %v483, 0.0
      %v508 = vadd.f32 %v506, %v507
      %v509 = vsel %vm436, %v484, 0.0
      %v510 = vadd.f32 %v508, %v509
      %v511 = vsel %vm436, %v485, 0.0
      %v512 = vadd.f32 %v510, %v511
      %v513 = vsel %vm436, %v486, 0.0
      %v514 = vadd.f32 %v512, %v513
      %v515 = vsel %vm436, %v487, 0.0
      %v516 = vadd.f32 %v514, %v515
      %v517 = vsel %vm436, %v488, 0.0
      %v518 = vadd.f32 %v516, %v517
      %v519 = vsel %vm436, %v489, 0.0
      %v520 = vadd.f32 %v518, %v519
      %v521 = vrot.slane %v520, 4
      %v522 = vadd.f32 %v520, %v521
      %v523 = vrot.slane %v522, 2
      %v524 = vadd.f32 %v522, %v523
      %v525 = vrot.slane %v524, 1
      %v526 = vadd.f32 %v524, %v525
      %vm527 = vcmask 1040384
      %v528 = vsel %vm527, %v473, %v526
      %v530 = vsel %vm436, %v528, 0
      %532 = vmatprep.subr.mxu0 0.0
      %533 = vmatpush1.msra.mxu0 %v400
      %534 = vmatprep.subr.mxu0 0.0
      %535 = vmatpush1.msra.mxu0 %v401
      %536 = vmatprep.subr.mxu0 0.0
      %537 = vmatpush1.msra.mxu0 %v402
      %538 = vmatprep.subr.mxu0 0.0
      %539 = vmatpush1.msra.mxu0 %v403
      %540 = vmatprep.subr.mxu0 0.0
      %541 = vmatpush1.msra.mxu0 %v404
      %542 = vmatprep.subr.mxu0 0.0
      %543 = vmatpush1.msra.mxu0 %v405
      %544 = vmatprep.subr.mxu0 0.0
      %545 = vmatpush1.msra.mxu0 %v406
      %546 = vmatprep.subr.mxu0 0.0
      %547 = vmatpush1.msra.mxu0 %v407
      %548 = vmatprep.subr.mxu0 0.0
      %549 = vmatpush1.msra.mxu0 0.0
      %550 = vmatprep.subr.mxu0 0.0
      %551 = vmatpush1.msra.mxu0 0.0
      %552 = vmatprep.subr.mxu0 0.0
      %553 = vmatpush1.msra.mxu0 0.0
      %554 = vmatprep.subr.mxu0 0.0
      %555 = vmatpush1.msra.mxu0 0.0
      %556 = vmatprep.subr.mxu0 0.0
      %557 = vmatpush1.msra.mxu0 0.0
      %558 = vmatprep.subr.mxu0 0.0
      %559 = vmatpush1.msra.mxu0 0.0
      %560 = vmatprep.subr.mxu0 0.0
      %561 = vmatpush1.msra.mxu0 0.0
      %562 = vmatprep.subr.mxu0 0.0
      %563 = vmatpush1.msra.mxu0 0.0
      %564 = vmatprep.subr.mxu0 0.0
      %565 = vmatpush1.msra.mxu0 0.0
      %566 = vmatprep.subr.mxu0 0.0
      %567 = vmatpush1.msra.mxu0 0.0
      %568 = vmatprep.subr.mxu0 0.0
      %569 = vmatpush1.msra.mxu0 0.0
      %570 = vmatprep.subr.mxu0 0.0
      %571 = vmatpush1.msra.mxu0 0.0
      %572 = vmatprep.subr.mxu0 0.0
      %573 = vmatpush1.msra.mxu0 0.0
      %574 = vmatprep.subr.mxu0 0.0
      %575 = vmatpush1.msra.mxu0 0.0
      %576 = vmatprep.subr.mxu0 0.0
      %577 = vmatpush1.msra.mxu0 0.0
      %578 = vmatprep.subr.mxu0 0.0
      %579 = vmatpush1.msra.mxu0 0.0
      %580 = vmatprep.subr.mxu0 0.0
      %581 = vmatpush1.msra.mxu0 0.0
      %582 = vmatprep.subr.mxu0 0.0
      %583 = vmatpush1.msra.mxu0 0.0
      %584 = vmatprep.subr.mxu0 0.0
      %585 = vmatpush1.msra.mxu0 0.0
      %586 = vmatprep.subr.mxu0 0.0
      %587 = vmatpush1.msra.mxu0 0.0
      %588 = vmatprep.subr.mxu0 0.0
      %589 = vmatpush1.msra.mxu0 0.0
      %590 = vmatprep.subr.mxu0 0.0
      %591 = vmatpush1.msra.mxu0 0.0
      %592 = vmatprep.subr.mxu0 0.0
      %593 = vmatpush1.msra.mxu0 0.0
      %594 = vmatprep.subr.mxu0 0.0
      %595 = vmatpush1.msra.mxu0 0.0
      %596 = vmatprep.mubr.f32.mxu0 0.0
      %597 = vmatmul.mubr.f32.gmra.mrb[0].mxu0 %v530
      %v598 = vpop.f32.mrb[0].mxu0
      %v599 = vadd.f32 0.0, %v598
      %v600 = vpop.f32.mrb[0].mxu0
      %601 = vdwg.mxu0
      %vm602 = vcmask 261120
      %v604 = vsel %vm602, %v599, 0
      %606 = vmatprep.subr.mxu0 0.0
      %607 = vmatpush1.msra.mxu0 %v432
      %608 = vmatprep.subr.mxu0 0.0
      %609 = vmatpush1.msra.mxu0 %v433
      %610 = vmatprep.subr.mxu0 0.0
      %611 = vmatpush1.msra.mxu0 %v434
      %612 = vmatprep.subr.mxu0 0.0
      %613 = vmatpush1.msra.mxu0 %v435
      %614 = vmatprep.subr.mxu0 0.0
      %615 = vmatpush1.msra.mxu0 0.0
      %616 = vmatprep.subr.mxu0 0.0
      %617 = vmatpush1.msra.mxu0 0.0
      %618 = vmatprep.subr.mxu0 0.0
      %619 = vmatpush1.msra.mxu0 0.0
      %620 = vmatprep.subr.mxu0 0.0
      %621 = vmatpush1.msra.mxu0 0.0
      %622 = vmatprep.subr.mxu0 0.0
      %623 = vmatpush1.msra.mxu0 0.0
      %624 = vmatprep.subr.mxu0 0.0
      %625 = vmatpush1.msra.mxu0 0.0
      %626 = vmatprep.subr.mxu0 0.0
      %627 = vmatpush1.msra.mxu0 0.0
      %628 = vmatprep.subr.mxu0 0.0
      %629 = vmatpush1.msra.mxu0 0.0
      %630 = vmatprep.subr.mxu0 0.0
      %631 = vmatpush1.msra.mxu0 0.0
      %632 = vmatprep.subr.mxu0 0.0
      %633 = vmatpush1.msra.mxu0 0.0
      %634 = vmatprep.subr.mxu0 0.0
      %635 = vmatpush1.msra.mxu0 0.0
      %636 = vmatprep.subr.mxu0 0.0
      %637 = vmatpush1.msra.mxu0 0.0
      %638 = vmatprep.subr.mxu0 0.0
      %639 = vmatpush1.msra.mxu0 0.0
      %640 = vmatprep.subr.mxu0 0.0
      %641 = vmatpush1.msra.mxu0 0.0
      %642 = vmatprep.subr.mxu0 0.0
      %643 = vmatpush1.msra.mxu0 0.0
      %644 = vmatprep.subr.mxu0 0.0
      %645 = vmatpush1.msra.mxu0 0.0
      %646 = vmatprep.subr.mxu0 0.0
      %647 = vmatpush1.msra.mxu0 0.0
      %648 = vmatprep.subr.mxu0 0.0
      %649 = vmatpush1.msra.mxu0 0.0
      %650 = vmatprep.subr.mxu0 0.0
      %651 = vmatpush1.msra.mxu0 0.0
      %652 = vmatprep.subr.mxu0 0.0
      %653 = vmatpush1.msra.mxu0 0.0
      %654 = vmatprep.subr.mxu0 0.0
      %655 = vmatpush1.msra.mxu0 0.0
      %656 = vmatprep.subr.mxu0 0.0
      %657 = vmatpush1.msra.mxu0 0.0
      %658 = vmatprep.subr.mxu0 0.0
      %659 = vmatpush1.msra.mxu0 0.0
      %660 = vmatprep.subr.mxu0 0.0
      %661 = vmatpush1.msra.mxu0 0.0
      %662 = vmatprep.subr.mxu0 0.0
      %663 = vmatpush1.msra.mxu0 0.0
      %664 = vmatprep.subr.mxu0 0.0
      %665 = vmatpush1.msra.mxu0 0.0
      %666 = vmatprep.subr.mxu0 0.0
      %667 = vmatpush1.msra.mxu0 0.0
      %668 = vmatprep.subr.mxu0 0.0
      %669 = vmatpush1.msra.mxu0 0.0
      %670 = vmatprep.mubr.f32.mxu0 0.0
      %671 = vmatmul.mubr.f32.gmra.mrb[0].mxu0 %v604
      %v672 = vpop.f32.mrb[0].mxu0
      %v673 = vadd.f32 0.0, %v672
      %v674 = vpop.f32.mrb[0].mxu0
      %675 = vdwg.mxu0
      %v676 = vrcp.pop 256.0
      %v677 = vmul.f32 %v673, %v676
      %v678 = vmul.f32 %v677, %v677
      %v680 = vrot.slane %v678, 7
      %v682 = vsub.f32 %v677, %v680
      %v683 = vadd.f32 %v682, 1e-05
      %v684 = vrsqrt.pop %v683
      %v686 = vlaneseq
      %v687 = vshrl.u32 %v686, 7
      %v688 = vsub.s32 0, %v687
      %v689 = vrot.slane %v352, %v688
      %v691 = vmul.f32 %v684, %v689
      %v693 = vrot.slane %v691, 1
      %v695 = vmul.f32 %v677, %v693
      %v696 = vsub.f32 %v353, %v695
      %v697 = vlaneseq
      %v698 = vshrl.u32 %v697, 7
      %v699 = vsub.s32 1, %v698
      %v700 = vrot.slane %v691, %v699
      %v701 = vmul.f32 %v336, %v700
      %v702 = vmul.f32 %v337, %v700
      %v703 = vmul.f32 %v338, %v700
      %v704 = vmul.f32 %v339, %v700
      %v705 = vmul.f32 %v340, %v700
      %v706 = vmul.f32 %v341, %v700
      %v707 = vmul.f32 %v342, %v700
      %v708 = vmul.f32 %v343, %v700
      %v709 = vmul.f32 %v344, %v700
      %v710 = vmul.f32 %v345, %v700
      %v711 = vmul.f32 %v346, %v700
      %v712 = vmul.f32 %v347, %v700
      %v713 = vmul.f32 %v348, %v700
      %v714 = vmul.f32 %v349, %v700
      %v715 = vmul.f32 %v350, %v700
      %v716 = vmul.f32 %v351, %v700
      %v718 = vlaneseq
      %v719 = vshrl.u32 %v718, 7
      %v720 = vsub.s32 0, %v719
      %v721 = vrot.slane %v696, %v720
      %v723 = vadd.f32 %v701, %v721
      %v724 = vadd.f32 %v702, %v721
      %v725 = vadd.f32 %v703, %v721
      %v726 = vadd.f32 %v704, %v721
      %v727 = vadd.f32 %v705, %v721
      %v728 = vadd.f32 %v706, %v721
      %v729 = vadd.f32 %v707, %v721
      %v730 = vadd.f32 %v708, %v721
      %v731 = vadd.f32 %v709, %v721
      %v732 = vadd.f32 %v710, %v721
      %v733 = vadd.f32 %v711, %v721
      %v734 = vadd.f32 %v712, %v721
      %v735 = vadd.f32 %v713, %v721
      %v736 = vadd.f32 %v714, %v721
      %v737 = vadd.f32 %v715, %v721
      %v738 = vadd.f32 %v716, %v721
      %v739 = vxor.u32 %v723, 2147483648
      %v740 = vxor.u32 %v724, 2147483648
      %v741 = vxor.u32 %v725, 2147483648
      %v742 = vxor.u32 %v726, 2147483648
      %v743 = vxor.u32 %v727, 2147483648
      %v744 = vxor.u32 %v728, 2147483648
      %v745 = vxor.u32 %v729, 2147483648
      %v746 = vxor.u32 %v730, 2147483648
      %v747 = vxor.u32 %v731, 2147483648
      %v748 = vxor.u32 %v732, 2147483648
      %v749 = vxor.u32 %v733, 2147483648
      %v750 = vxor.u32 %v734, 2147483648
      %v751 = vxor.u32 %v735, 2147483648
      %v752 = vxor.u32 %v736, 2147483648
      %v753 = vxor.u32 %v737, 2147483648
      %v754 = vxor.u32 %v738, 2147483648
      %v755 = vmul.f32 %v739, 1.442695
      %v756 = vpow.pop %v755
      %v757 = vmul.f32 %v740, 1.442695
      %v758 = vpow.pop %v757
      %v759 = vmul.f32 %v741, 1.442695
      %v760 = vpow.pop %v759
      %v761 = vmul.f32 %v742, 1.442695
      %v762 = vpow.pop %v761
      %v763 = vmul.f32 %v743, 1.442695
      %v764 = vpow.pop %v763
      %v765 = vmul.f32 %v744, 1.442695
      %v766 = vpow.pop %v765
      %v767 = vmul.f32 %v745, 1.442695
      %v768 = vpow.pop %v767
      %v769 = vmul.f32 %v746, 1.442695
      %v770 = vpow.pop %v769
      %v771 = vmul.f32 %v747, 1.442695
      %v772 = vpow.pop %v771
      %v773 = vmul.f32 %v748, 1.442695
      %v774 = vpow.pop %v773
      %v775 = vmul.f32 %v749, 1.442695
      %v776 = vpow.pop %v775
      %v777 = vmul.f32 %v750, 1.442695
      %v778 = vpow.pop %v777
      %v779 = vmul.f32 %v751, 1.442695
      %v780 = vpow.pop %v779
      %v781 = vmul.f32 %v752, 1.442695
      %v782 = vpow.pop %v781
      %v783 = vmul.f32 %v753, 1.442695
      %v784 = vpow.pop %v783
      %v785 = vmul.f32 %v754, 1.442695
      %v786 = vpow.pop %v785
      %v787 = vadd.f32 %v756, 1.0
      %v788 = vadd.f32 %v758, 1.0
      %v789 = vadd.f32 %v760, 1.0
      %v790 = vadd.f32 %v762, 1.0
      %v791 = vadd.f32 %v764, 1.0
      %v792 = vadd.f32 %v766, 1.0
      %v793 = vadd.f32 %v768, 1.0
      %v794 = vadd.f32 %v770, 1.0
      %v795 = vadd.f32 %v772, 1.0
      %v796 = vadd.f32 %v774, 1.0
      %v797 = vadd.f32 %v776, 1.0
      %v798 = vadd.f32 %v778, 1.0
      %v799 = vadd.f32 %v780, 1.0
      %v800 = vadd.f32 %v782, 1.0
      %v801 = vadd.f32 %v784, 1.0
      %v802 = vadd.f32 %v786, 1.0
      %v803 = vrcp.pop %v787
      %v804 = vmul.f32 1.0, %v803
      %v805 = vrcp.pop %v788
      %v806 = vmul.f32 1.0, %v805
      %v807 = vrcp.pop %v789
      %v808 = vmul.f32 1.0, %v807
      %v809 = vrcp.pop %v790
      %v810 = vmul.f32 1.0, %v809
      %v811 = vrcp.pop %v791
      %v812 = vmul.f32 1.0, %v811
      %v813 = vrcp.pop %v792
      %v814 = vmul.f32 1.0, %v813
      %v815 = vrcp.pop %v793
      %v816 = vmul.f32 1.0, %v815
      %v817 = vrcp.pop %v794
      %v818 = vmul.f32 1.0, %v817
      %v819 = vrcp.pop %v795
      %v820 = vmul.f32 1.0, %v819
      %v821 = vrcp.pop %v796
      %v822 = vmul.f32 1.0, %v821
      %v823 = vrcp.pop %v797
      %v824 = vmul.f32 1.0, %v823
      %v825 = vrcp.pop %v798
      %v826 = vmul.f32 1.0, %v825
      %v827 = vrcp.pop %v799
      %v828 = vmul.f32 1.0, %v827
      %v829 = vrcp.pop %v800
      %v830 = vmul.f32 1.0, %v829
      %v831 = vrcp.pop %v801
      %v832 = vmul.f32 1.0, %v831
      %v833 = vrcp.pop %v802
      %v834 = vmul.f32 1.0, %v833
      %v835 = vmul.f32 %v723, %v804
      %v836 = vmul.f32 %v724, %v806
      %v837 = vmul.f32 %v725, %v808
      %v838 = vmul.f32 %v726, %v810
      %v839 = vmul.f32 %v727, %v812
      %v840 = vmul.f32 %v728, %v814
      %v841 = vmul.f32 %v729, %v816
      %v842 = vmul.f32 %v730, %v818
      %v843 = vmul.f32 %v731, %v820
      %v844 = vmul.f32 %v732, %v822
      %v845 = vmul.f32 %v733, %v824
      %v846 = vmul.f32 %v734, %v826
      %v847 = vmul.f32 %v735, %v828
      %v848 = vmul.f32 %v736, %v830
      %v849 = vmul.f32 %v737, %v832
      %v850 = vmul.f32 %v738, %v834
      %867 = vrot.lane.b32.xlu0 %v835, 64
      %v868 = vpop.permute.xlu0 %867
      %869 = vrot.lane.b32.xlu0 %v836, 64
      %v870 = vpop.permute.xlu0 %869
      %871 = vrot.lane.b32.xlu0 %v837, 64
      %v872 = vpop.permute.xlu0 %871
      %873 = vrot.lane.b32.xlu0 %v838, 64
      %v874 = vpop.permute.xlu0 %873
      %875 = vrot.lane.b32.xlu0 %v839, 64
      %v876 = vpop.permute.xlu0 %875
      %877 = vrot.lane.b32.xlu0 %v840, 64
      %v878 = vpop.permute.xlu0 %877
      %879 = vrot.lane.b32.xlu0 %v841, 64
      %v880 = vpop.permute.xlu0 %879
      %881 = vrot.lane.b32.xlu0 %v842, 64
      %v882 = vpop.permute.xlu0 %881
      %883 = vrot.lane.b32.xlu0 %v843, 64
      %v884 = vpop.permute.xlu0 %883
      %885 = vrot.lane.b32.xlu0 %v844, 64
      %v886 = vpop.permute.xlu0 %885
      %887 = vrot.lane.b32.xlu0 %v845, 64
      %v888 = vpop.permute.xlu0 %887
      %889 = vrot.lane.b32.xlu0 %v846, 64
      %v890 = vpop.permute.xlu0 %889
      %891 = vrot.lane.b32.xlu0 %v847, 64
      %v892 = vpop.permute.xlu0 %891
      %893 = vrot.lane.b32.xlu0 %v848, 64
      %v894 = vpop.permute.xlu0 %893
      %895 = vrot.lane.b32.xlu0 %v849, 64
      %v896 = vpop.permute.xlu0 %895
      %897 = vrot.lane.b32.xlu0 %v850, 64
      %v898 = vpop.permute.xlu0 %897
      %v915 = vsel %vm436, 0.0, %v868
      %v916 = vsel %vm436, 0.0, %v870
      %v917 = vsel %vm436, %v835, %v872
      %v918 = vsel %vm436, %v836, %v874
      %v919 = vsel %vm436, %v837, %v876
      %v920 = vsel %vm436, %v838, %v878
      %v921 = vsel %vm436, %v839, %v880
      %v922 = vsel %vm436, %v840, %v882
      %v923 = vsel %vm436, %v841, %v884
      %v924 = vsel %vm436, %v842, %v886
      %v925 = vsel %vm436, %v843, %v888
      %v926 = vsel %vm436, %v844, %v890
      %v927 = vsel %vm436, %v845, %v892
      %v928 = vsel %vm436, %v846, %v894
      %v929 = vsel %vm436, %v847, %v896
      %v930 = vsel %vm436, %v848, %v898
      %v931 = vld [vmem:[%s290] sm:$0xf]
      %v932 = vld [vmem:[%s290 + $0x4] sm:$0xf]
      %v933 = vld [vmem:[%s290 + $0x8] sm:$0xf]
      %v934 = vld [vmem:[%s290 + $0xc] sm:$0xf]
      %v935 = vld [vmem:[%s290 + $0x10] sm:$0xf]
      %v936 = vld [vmem:[%s290 + $0x14] sm:$0xf]
      %v937 = vld [vmem:[%s290 + $0x18] sm:$0xf]
      %v938 = vld [vmem:[%s290 + $0x1c] sm:$0xf]
      %v939 = vld [vmem:[%s290 + $0x20] sm:$0xf]
      %v940 = vld [vmem:[%s290 + $0x24] sm:$0xf]
      %v941 = vld [vmem:[%s290 + $0x28] sm:$0xf]
      %v942 = vld [vmem:[%s290 + $0x2c] sm:$0xf]
      %v943 = vld [vmem:[%s290 + $0x30] sm:$0xf]
      %v944 = vld [vmem:[%s290 + $0x34] sm:$0xf]
      %v945 = vld [vmem:[%s290 + $0x38] sm:$0xf]
      %v946 = vld [vmem:[%s290 + $0x3c] sm:$0xf]
      %v947 = vld [vmem:[%s290 + $0x40] sm:$0xf]
      %v948 = vld [vmem:[%s290 + $0x44] sm:$0xf]
      %v949 = vld [vmem:[%s290 + $0x48] sm:$0xf]
      %v950 = vld [vmem:[%s290 + $0x4c] sm:$0xf]
      %v951 = vld [vmem:[%s290 + $0x50] sm:$0xf]
      %v952 = vld [vmem:[%s290 + $0x54] sm:$0xf]
      %v953 = vld [vmem:[%s290 + $0x58] sm:$0xf]
      %v954 = vld [vmem:[%s290 + $0x5c] sm:$0xf]
      %v955 = vunpack.c.l.bf16 %v931
      %v956 = vunpack.c.l.bf16 %v932
      %v957 = vunpack.c.l.bf16 %v933
      %v958 = vunpack.c.l.bf16 %v934
      %v959 = vunpack.c.l.bf16 %v935
      %v960 = vunpack.c.l.bf16 %v936
      %v961 = vunpack.c.l.bf16 %v937
      %v962 = vunpack.c.l.bf16 %v938
      %v963 = vunpack.c.l.bf16 %v939
      %v964 = vunpack.c.l.bf16 %v940
      %v965 = vunpack.c.l.bf16 %v941
      %v966 = vunpack.c.l.bf16 %v942
      %v967 = vunpack.c.l.bf16 %v943
      %v968 = vunpack.c.l.bf16 %v944
      %v969 = vunpack.c.l.bf16 %v945
      %v970 = vunpack.c.l.bf16 %v946
      %v971 = vunpack.c.l.bf16 %v947
      %v972 = vunpack.c.l.bf16 %v948
      %v973 = vunpack.c.l.bf16 %v949
      %v974 = vunpack.c.l.bf16 %v950
      %v975 = vunpack.c.l.bf16 %v951
      %v976 = vunpack.c.l.bf16 %v952
      %v977 = vunpack.c.l.bf16 %v953
      %v978 = vunpack.c.l.bf16 %v954
      %v980 = vlaneseq
      %v981 = vshrl.u32 %v980, 7
      %v982 = vsub.s32 0, %v981
      %v983 = vrot.slane %v354, %v982
      %v985 = vsel %vm436, %v837, 0
      %v987 = vsel %vm436, %v838, 0
      %v989 = vsel %vm436, %v839, 0
      %v991 = vsel %vm436, %v840, 0
      %v993 = vsel %vm436, %v841, 0
      %v995 = vsel %vm436, %v842, 0
      %v997 = vsel %vm436, %v843, 0
      %v999 = vsel %vm436, %v844, 0
      %v1001 = vsel %vm436, %v845, 0
      %v1003 = vsel %vm436, %v846, 0
      %v1005 = vsel %vm436, %v847, 0
      %v1007 = vsel %vm436, %v848, 0
      %v1009 = vsel %vm436, %v849, 0
      %v1011 = vsel %vm436, %v850, 0
      %v1014 = vsel %vm436, 0.0, 0
      %1016 = vmatprep.subr.mxu0 0.0
      %1017 = vmatpush1.msra.mxu0 %v955
      %1018 = vmatprep.subr.mxu0 0.0
      %1019 = vmatpush1.msra.mxu0 %v956
      %1020 = vmatprep.subr.mxu0 0.0
      %1021 = vmatpush1.msra.mxu0 %v957
      %1022 = vmatprep.subr.mxu0 0.0
      %1023 = vmatpush1.msra.mxu0 %v958
      %1024 = vmatprep.subr.mxu0 0.0
      %1025 = vmatpush1.msra.mxu0 %v959
      %1026 = vmatprep.subr.mxu0 0.0
      %1027 = vmatpush1.msra.mxu0 %v960
      %1028 = vmatprep.subr.mxu0 0.0
      %1029 = vmatpush1.msra.mxu0 %v961
      %1030 = vmatprep.subr.mxu0 0.0
      %1031 = vmatpush1.msra.mxu0 %v962
      %1032 = vmatprep.subr.mxu0 0.0
      %1033 = vmatpush1.msra.mxu0 %v963
      %1034 = vmatprep.subr.mxu0 0.0
      %1035 = vmatpush1.msra.mxu0 %v964
      %1036 = vmatprep.subr.mxu0 0.0
      %1037 = vmatpush1.msra.mxu0 %v965
      %1038 = vmatprep.subr.mxu0 0.0
      %1039 = vmatpush1.msra.mxu0 %v966
      %1040 = vmatprep.subr.mxu0 0.0
      %1041 = vmatpush1.msra.mxu0 %v967
      %1042 = vmatprep.subr.mxu0 0.0
      %1043 = vmatpush1.msra.mxu0 %v968
      %1044 = vmatprep.subr.mxu0 0.0
      %1045 = vmatpush1.msra.mxu0 %v969
      %1046 = vmatprep.subr.mxu0 0.0
      %1047 = vmatpush1.msra.mxu0 %v970
      %1048 = vmatprep.subr.mxu0 0.0
      %1049 = vmatpush1.msra.mxu0 %v971
      %1050 = vmatprep.subr.mxu0 0.0
      %1051 = vmatpush1.msra.mxu0 %v972
      %1052 = vmatprep.subr.mxu0 0.0
      %1053 = vmatpush1.msra.mxu0 %v973
      %1054 = vmatprep.subr.mxu0 0.0
      %1055 = vmatpush1.msra.mxu0 %v974
      %1056 = vmatprep.subr.mxu0 0.0
      %1057 = vmatpush1.msra.mxu0 %v975
      %1058 = vmatprep.subr.mxu0 0.0
      %1059 = vmatpush1.msra.mxu0 %v976
      %1060 = vmatprep.subr.mxu0 0.0
      %1061 = vmatpush1.msra.mxu0 %v977
      %1062 = vmatprep.subr.mxu0 0.0
      %1063 = vmatpush1.msra.mxu0 %v978
      %1064 = vmatprep.subr.mxu0 0.0
      %1065 = vmatpush1.msra.mxu0 0.0
      %1066 = vmatprep.subr.mxu0 0.0
      %1067 = vmatpush1.msra.mxu0 0.0
      %1068 = vmatprep.subr.mxu0 0.0
      %1069 = vmatpush1.msra.mxu0 0.0
      %1070 = vmatprep.subr.mxu0 0.0
      %1071 = vmatpush1.msra.mxu0 0.0
      %1072 = vmatprep.subr.mxu0 0.0
      %1073 = vmatpush1.msra.mxu0 0.0
      %1074 = vmatprep.subr.mxu0 0.0
      %1075 = vmatpush1.msra.mxu0 0.0
      %1076 = vmatprep.subr.mxu0 0.0
      %1077 = vmatpush1.msra.mxu0 0.0
      %1078 = vmatprep.subr.mxu0 0.0
      %1079 = vmatpush1.msra.mxu0 0.0
      %1080 = vmatprep.mubr.f32.mxu0 %v985
      %1081 = vmatmul.mubr.f32.gmra.mrb[0].mxu0 %v915
      %v1082 = vpop.f32.mrb[0].mxu0
      %v1083 = vadd.f32 %v983, %v1082
      %v1084 = vpop.f32.mrb[0].mxu0
      %1085 = vmatprep.mubr.f32.mxu0 %v987
      %1086 = vmatmul.mubr.f32.gmra.mrb[0].mxu0 %v916
      %v1087 = vpop.f32.mrb[0].mxu0
      %v1088 = vadd.f32 %v983, %v1087
      %v1089 = vpop.f32.mrb[0].mxu0
      %1090 = vmatprep.mubr.f32.mxu0 %v989
      %1091 = vmatmul.mubr.f32.gmra.mrb[0].mxu0 %v917
      %v1092 = vpop.f32.mrb[0].mxu0
      %v1093 = vadd.f32 %v983, %v1092
      %v1094 = vpop.f32.mrb[0].mxu0
      %1095 = vmatprep.mubr.f32.mxu0 %v991
      %1096 = vmatmul.mubr.f32.gmra.mrb[0].mxu0 %v918
      %v1097 = vpop.f32.mrb[0].mxu0
      %v1098 = vadd.f32 %v983, %v1097
      %v1099 = vpop.f32.mrb[0].mxu0
      %1100 = vmatprep.mubr.f32.mxu0 %v993
      %1101 = vmatmul.mubr.f32.gmra.mrb[0].mxu0 %v919
      %v1102 = vpop.f32.mrb[0].mxu0
      %v1103 = vadd.f32 %v983, %v1102
      %v1104 = vpop.f32.mrb[0].mxu0
      %1105 = vmatprep.mubr.f32.mxu0 %v995
      %1106 = vmatmul.mubr.f32.gmra.mrb[0].mxu0 %v920
      %v1107 = vpop.f32.mrb[0].mxu0
      %v1108 = vadd.f32 %v983, %v1107
      %v1109 = vpop.f32.mrb[0].mxu0
      %1110 = vmatprep.mubr.f32.mxu0 %v997
      %1111 = vmatmul.mubr.f32.gmra.mrb[0].mxu0 %v921
      %v1112 = vpop.f32.mrb[0].mxu0
      %v1113 = vadd.f32 %v983, %v1112
      %v1114 = vpop.f32.mrb[0].mxu0
      %1115 = vmatprep.mubr.f32.mxu0 %v999
      %1116 = vmatmul.mubr.f32.gmra.mrb[0].mxu0 %v922
      %v1117 = vpop.f32.mrb[0].mxu0
      %v1118 = vadd.f32 %v983, %v1117
      %v1119 = vpop.f32.mrb[0].mxu0
      %1120 = vmatprep.mubr.f32.mxu0 %v1001
      %1121 = vmatmul.mubr.f32.gmra.mrb[0].mxu0 %v923
      %v1122 = vpop.f32.mrb[0].mxu0
      %v1123 = vadd.f32 %v983, %v1122
      %v1124 = vpop.f32.mrb[0].mxu0
      %1125 = vmatprep.mubr.f32.mxu0 %v1003
      %1126 = vmatmul.mubr.f32.gmra.mrb[0].mxu0 %v924
      %v1127 = vpop.f32.mrb[0].mxu0
      %v1128 = vadd.f32 %v983, %v1127
      %v1129 = vpop.f32.mrb[0].mxu0
      %1130 = vmatprep.mubr.f32.mxu0 %v1005
      %1131 = vmatmul.mubr.f32.gmra.mrb[0].mxu0 %v925
      %v1132 = vpop.f32.mrb[0].mxu0
      %v1133 = vadd.f32 %v983, %v1132
      %v1134 = vpop.f32.mrb[0].mxu0
      %1135 = vmatprep.mubr.f32.mxu0 %v1007
      %1136 = vmatmul.mubr.f32.gmra.mrb[0].mxu0 %v926
      %v1137 = vpop.f32.mrb[0].mxu0
      %v1138 = vadd.f32 %v983, %v1137
      %v1139 = vpop.f32.mrb[0].mxu0
      %1140 = vmatprep.mubr.f32.mxu0 %v1009
      %1141 = vmatmul.mubr.f32.gmra.mrb[0].mxu0 %v927
      %v1142 = vpop.f32.mrb[0].mxu0
      %v1143 = vadd.f32 %v983, %v1142
      %v1144 = vpop.f32.mrb[0].mxu0
      %1145 = vmatprep.mubr.f32.mxu0 %v1011
      %1146 = vmatmul.mubr.f32.gmra.mrb[0].mxu0 %v928
      %v1147 = vpop.f32.mrb[0].mxu0
      %v1148 = vadd.f32 %v983, %v1147
      %v1149 = vpop.f32.mrb[0].mxu0
      %1150 = vmatprep.mubr.f32.mxu0 %v1014
      %1151 = vmatmul.mubr.f32.gmra.mrb[0].mxu0 %v929
      %v1152 = vpop.f32.mrb[0].mxu0
      %v1153 = vadd.f32 %v983, %v1152
      %v1154 = vpop.f32.mrb[0].mxu0
      %1155 = vmatprep.mubr.f32.mxu0 %v1014
      %1156 = vmatmul.mubr.f32.gmra.mrb[0].mxu0 %v930
      %v1157 = vpop.f32.mrb[0].mxu0
      %v1158 = vadd.f32 %v983, %v1157
      %v1159 = vpop.f32.mrb[0].mxu0
      %1160 = vdwg.mxu0
      %p1161 = scmp.lt.s32.totalorder %s21, 3
      // Predicated region
      $region45: #{tpu_custom_call.1} parent=39 // pred_check
        %p1162 = pneg %p1161
      $region46: #{tpu_custom_call.1} parent=39 // pred_check_branch
        %1164 = sbr.rel (%p1162) target = $region48
      $region47: #{tpu_custom_call.1} parent=39 // pred_region
        %1165 = vst.msk [vmem:[#allocation2] sm:$0xff] %vm436, %v1083
        %1166 = vst.msk [vmem:[#allocation2 + $0x8] sm:$0xff] %vm436, %v1088
        %1167 = vst.msk [vmem:[#allocation2 + $0x10] sm:$0xff] %vm436, %v1093
        %1168 = vst.msk [vmem:[#allocation2 + $0x18] sm:$0xff] %vm436, %v1098
        %1169 = vst.msk [vmem:[#allocation2 + $0x20] sm:$0xff] %vm436, %v1103
        %1170 = vst.msk [vmem:[#allocation2 + $0x28] sm:$0xff] %vm436, %v1108
        %1171 = vst.msk [vmem:[#allocation2 + $0x30] sm:$0xff] %vm436, %v1113
        %1172 = vst.msk [vmem:[#allocation2 + $0x38] sm:$0xff] %vm436, %v1118
        %1173 = vst.msk [vmem:[#allocation2 + $0x40] sm:$0xff] %vm436, %v1123
        %1174 = vst.msk [vmem:[#allocation2 + $0x48] sm:$0xff] %vm436, %v1128
        %1175 = vst.msk [vmem:[#allocation2 + $0x50] sm:$0xff] %vm436, %v1133
        %1176 = vst.msk [vmem:[#allocation2 + $0x58] sm:$0xff] %vm436, %v1138
        %1177 = vst.msk [vmem:[#allocation2 + $0x60] sm:$0xff] %vm436, %v1143
        %1178 = vst.msk [vmem:[#allocation2 + $0x68] sm:$0xff] %vm436, %v1148
        %1179 = vst.msk [vmem:[#allocation2 + $0x70] sm:$0xff] %vm436, %v1153
        %1180 = vst.msk [vmem:[#allocation2 + $0x78] sm:$0xff] %vm436, %v1158
      $region48: #{tpu_custom_call.1} parent=39 // pred_fallthru
        _
      %p1181 = scmp.eq.s32.totalorder %s21, 3
      // Predicated region
      $region49: #{tpu_custom_call.1} parent=39 // pred_check
        %p1182 = pneg %p1181
      $region50: #{tpu_custom_call.1} parent=39 // pred_check_branch
        %1184 = sbr.rel (%p1182) target = $region52
      $region51: #{tpu_custom_call.1} parent=39 // pred_region
        %v1185 = vld [vmem:[%s279] sm:$0xff]
        %v1186 = vld [vmem:[%s279 + $0x8] sm:$0xff]
        %v1187 = vld [vmem:[%s279 + $0x10] sm:$0xff]
        %v1188 = vld [vmem:[%s279 + $0x18] sm:$0xff]
        %v1189 = vld [vmem:[%s279 + $0x20] sm:$0xff]
        %v1190 = vld [vmem:[%s279 + $0x28] sm:$0xff]
        %v1191 = vld [vmem:[%s279 + $0x30] sm:$0xff]
        %v1192 = vld [vmem:[%s279 + $0x38] sm:$0xff]
        %v1193 = vld [vmem:[%s279 + $0x40] sm:$0xff]
        %v1194 = vld [vmem:[%s279 + $0x48] sm:$0xff]
        %v1195 = vld [vmem:[%s279 + $0x50] sm:$0xff]
        %v1196 = vld [vmem:[%s279 + $0x58] sm:$0xff]
        %v1197 = vld [vmem:[%s279 + $0x60] sm:$0xff]
        %v1198 = vld [vmem:[%s279 + $0x68] sm:$0xff]
        %v1199 = vld [vmem:[%s279 + $0x70] sm:$0xff]
        %v1200 = vld [vmem:[%s279 + $0x78] sm:$0xff]
        %v1201 = vadd.f32 %v1185, %v1083
        %v1202 = vadd.f32 %v1186, %v1088
        %v1203 = vadd.f32 %v1187, %v1093
        %v1204 = vadd.f32 %v1188, %v1098
        %v1205 = vadd.f32 %v1189, %v1103
        %v1206 = vadd.f32 %v1190, %v1108
        %v1207 = vadd.f32 %v1191, %v1113
        %v1208 = vadd.f32 %v1192, %v1118
        %v1209 = vadd.f32 %v1193, %v1123
        %v1210 = vadd.f32 %v1194, %v1128
        %v1211 = vadd.f32 %v1195, %v1133
        %v1212 = vadd.f32 %v1196, %v1138
        %v1213 = vadd.f32 %v1197, %v1143
        %v1214 = vadd.f32 %v1198, %v1148
        %v1215 = vadd.f32 %v1199, %v1153
        %v1216 = vadd.f32 %v1200, %v1158
        %1217 = vst.msk [vmem:[%s298] sm:$0xff] %vm436, %v1201
        %1218 = vst.msk [vmem:[%s298 + $0x8] sm:$0xff] %vm436, %v1202
        %1219 = vst.msk [vmem:[%s298 + $0x10] sm:$0xff] %vm436, %v1203
        %1220 = vst.msk [vmem:[%s298 + $0x18] sm:$0xff] %vm436, %v1204
        %1221 = vst.msk [vmem:[%s298 + $0x20] sm:$0xff] %vm436, %v1205
        %1222 = vst.msk [vmem:[%s298 + $0x28] sm:$0xff] %vm436, %v1206
        %1223 = vst.msk [vmem:[%s298 + $0x30] sm:$0xff] %vm436, %v1207
        %1224 = vst.msk [vmem:[%s298 + $0x38] sm:$0xff] %vm436, %v1208
        %1225 = vst.msk [vmem:[%s298 + $0x40] sm:$0xff] %vm436, %v1209
        %1226 = vst.msk [vmem:[%s298 + $0x48] sm:$0xff] %vm436, %v1210
        %1227 = vst.msk [vmem:[%s298 + $0x50] sm:$0xff] %vm436, %v1211
        %1228 = vst.msk [vmem:[%s298 + $0x58] sm:$0xff] %vm436, %v1212
        %1229 = vst.msk [vmem:[%s298 + $0x60] sm:$0xff] %vm436, %v1213
        %1230 = vst.msk [vmem:[%s298 + $0x68] sm:$0xff] %vm436, %v1214
        %1231 = vst.msk [vmem:[%s298 + $0x70] sm:$0xff] %vm436, %v1215
        %1232 = vst.msk [vmem:[%s298 + $0x78] sm:$0xff] %vm436, %v1216
      $region52: #{tpu_custom_call.1} parent=39 // pred_fallthru
        _
      %p1233 = scmp.lt.s32.totalorder %s20, 1
      %s1234 = scalar_select %p1233, %s20, 1
      %s1235 = smul.addr %s1234, 16
      %s1236 = smul.addr %s1235, 8
      %s1237 = scalar_lea.vmem %s5, %s1236
      // Predicated region
      $region53: #{tpu_custom_call.1} parent=39 // pred_check
        %p1238 = pneg %p176
      $region54: #{tpu_custom_call.1} parent=39 // pred_check_branch
        %1240 = sbr.rel (%p1238) target = $region56
      $region55: #{tpu_custom_call.1} parent=39 // pred_region
        _
      $region56: #{tpu_custom_call.1} parent=39 // pred_fallthru
        _
    $region40: #{tpu_custom_call.1} parent=5 // pred_fallthru
      _
    %p1241 = scmp.le.s32.totalorder 2, %s11
    // Predicated region
    $region57: #{tpu_custom_call.1} parent=5 // pred_check
      %p1242 = pneg %p1241
    $region58: #{tpu_custom_call.1} parent=5 // pred_check_branch
      %1244 = sbr.rel (%p1242) target = $region60
    $region59: #{tpu_custom_call.1} parent=5 // pred_region
      %s1245 = ssub.s32 %s11, 2
      // Predicated region
      $region61: #{tpu_custom_call.1} parent=59 // pred_check
        %p1246 = pneg %p182
      $region62: #{tpu_custom_call.1} parent=59 // pred_check_branch
        %1248 = sbr.rel (%p1246) target = $region64
      $region63: #{tpu_custom_call.1} parent=59 // pred_region
        %p1249 = scmp.lt.s32.totalorder %s22, 1
        %s1250 = scalar_select %p1249, %s22, 1
        %s1251 = smul.addr %s1250, 16
        %s1252 = smul.addr %s1251, 8
        %s1253 = scalar_lea.vmem %s5, %s1252
      $region64: #{tpu_custom_call.1} parent=59 // pred_fallthru
        _
    $region60: #{tpu_custom_call.1} parent=5 // pred_fallthru
      _
  $region6: #{tpu_custom_call.1} parent=0 // loop_footer
    %s15 = sadd.s32 1, %s11
  $region7: #{tpu_custom_call.1} parent=0 // loop_footer_branch
    %10 = sbr.rel target = $region3
  $region8: #{tpu_custom_call.1} parent=0 // loop_exit
    _

</llo_original>
